<compile_context>
chip_gen: v6e
topology: v6e:2x2x1
jax: 0.10.0
libtpu: 0.0.40
codegen_flags: <defaults>
</compile_context>

<pallas_src>
import functools

import jax
import jax.numpy as jnp
from jax.experimental import pallas as pl
from jax.experimental.pallas import tpu as pltpu

_MIB = 1024 * 1024


def _round_up(x, m):
    return ((x + m - 1) // m) * m


@functools.lru_cache(maxsize=1)
def _vmem_capacity_bytes():
    """Physical VMEM (128 MiB on v5e/v6e, 64 MiB on v7x); conservative fallback."""
    try:
        return int(pltpu.get_tpu_info().vmem_capacity_bytes)
    except Exception:
        return 64 * _MIB


@functools.lru_cache(maxsize=1)
def _resident_single_buffer_ok():
    """Probe whether grid-invariant inputs can be single-buffered (pl.Buffered(1))."""
    try:
        def probe(a_ref, b_ref, o_ref):
            o_ref[...] = a_ref[...] + b_ref[...]

        f = pl.pallas_call(
            probe,
            out_shape=jax.ShapeDtypeStruct((16, 128), jnp.float32),
            grid=(2,),
            in_specs=[
                pl.BlockSpec((8, 128), lambda i: (i, 0)),
                pl.BlockSpec((8, 128), lambda i: (0, 0),
                             pipeline_mode=pl.Buffered(1)),
            ],
            out_specs=pl.BlockSpec((8, 128), lambda i: (i, 0)),
        )
        out = jax.block_until_ready(
            f(jnp.zeros((16, 128), jnp.float32), jnp.ones((8, 128), jnp.float32)))
        return bool(jnp.allclose(out, 1.0))
    except Exception:
        return False  # fall back to default double buffering


def _resident(shape):
    """Grid-resident VMEM operand (constant block index); single-buffered if possible."""
    if _resident_single_buffer_ok():
        return pl.BlockSpec(shape, lambda i: (0, 0), pipeline_mode=pl.Buffered(1))
    return pl.BlockSpec(shape, lambda i: (0, 0))


# ----------------------------- kernels --------------------------------------


def _mlp_fc1_kernel(x_ref, w1_ref, b1_ref, w2_ref, b2_ref, o_ref):
    """relu(x @ W1 + b1) projected to a single output via VPU multiply + reduce."""
    h = jnp.dot(x_ref[...], w1_ref[...], preferred_element_type=jnp.float32)
    h = jnp.maximum(h + b1_ref[...], 0.0)                     # bias + ReLU (f32, VPU)
    # hidden -> 1 head: multiply by the (1, H) f32 weight row and cross-lane
    # reduce (XLU); avoids a 1-column MXU matmul and is v5e-safe (f32 VPU).
    out = jnp.sum(h * w2_ref[...], axis=-1, keepdims=True) + b2_ref[0, 0]
    o_ref[...] = out.astype(o_ref.dtype)


def _mlp_fc_kernel(x_ref, w1_ref, b1_ref, w2_ref, b2_ref, o_ref):
    """relu(x @ W1 + b1) @ W2 + b2 (out_dim > 1, MXU head, f32 accumulation)."""
    h = jnp.dot(x_ref[...], w1_ref[...], preferred_element_type=jnp.float32)
    h = jnp.maximum(h + b1_ref[...], 0.0)
    out = jnp.dot(h.astype(w2_ref.dtype), w2_ref[...],
                  preferred_element_type=jnp.float32) + b2_ref[...]
    o_ref[...] = out.astype(o_ref.dtype)


def _mlp_nofc_kernel(x_ref, w1_ref, b1_ref, o_ref):
    h = jnp.dot(x_ref[...], w1_ref[...], preferred_element_type=jnp.float32)
    o_ref[...] = jnp.maximum(h + b1_ref[...], 0.0).astype(o_ref.dtype)


# ----------------------------- tiling plan -----------------------------------


def _plan_tiles(n, k, h, out_cols, x_bytes, out_bytes):
    """Row-tile size + vmem limit, budgeting every VMEM resident.

    Counts the double-buffered x tile (TM x K), the double-buffered output tile
    (TM x out_cols), the f32 hidden intermediate (TM x H), and the grid-resident
    weights/biases (counted double-buffered so the plan stays safe even when
    pl.Buffered(1) single-buffering is unavailable).
    """
    cap = _vmem_capacity_bytes()
    row_align = 8 if x_bytes >= 4 else 16            # f32 vs bf16 sublane packing
    weight_bytes = 2 * ((k * h + h * out_cols) * x_bytes + (h + out_cols) * 4)
    budget = (cap * 3) // 8                          # ~24 MiB v7x, ~48 MiB v5e/v6e
    avail = max(budget - weight_bytes, 2 * _MIB)
    per_row = 2 * k * x_bytes + 2 * out_cols * out_bytes + h * 4
    tm = max(row_align, min(avail // per_row, 4096))
    # Several grid steps (megacore sharding on v7x, DMA/compute overlap on all
    # chips) as long as each x tile keeps >= ~2 MiB to amortize the ~0.35us
    # per-grid-step overhead.
    min_rows = max(row_align, _round_up(2 * _MIB // max(1, k * x_bytes), row_align))
    tm = min(tm, max(min_rows, _round_up(pl.cdiv(n, 8), row_align)))
    tm = _round_up(tm, row_align)
    if tm >= n:
        tm = n                                       # single full-extent block (layout-exempt)
    vmem_need = (2 * tm * k * x_bytes + 2 * tm * out_cols * out_bytes
                 + tm * h * 4 + weight_bytes)
    vmem_limit = min((cap * 7) // 8, max(vmem_need + 8 * _MIB, 32 * _MIB))
    return tm, int(vmem_limit)


# ----------------------------- wrapper ---------------------------------------


@functools.partial(jax.jit, static_argnames=("has_fc", "use_bf16"))
def mlp_forward(x, params, *, has_fc=True, use_bf16=False):
    """Forward pass of the MLP.  x: any shape reshapeable to (-1, input_dim).

    use_bf16=True casts x/W1 (and W2 for the matmul head) to bfloat16 at the
    kernel boundary (f32 accumulation kept) to halve the dominant HBM stream;
    it deviates slightly from exact f32 PyTorch numerics, so it is off by
    default.
    """
    w1, b1, w2, b2 = params
    input_dim, hidden_dim = w1.shape
    x2d = x.reshape(-1, input_dim)                   # == x.view(-1, input_dim); no copy
    n = x2d.shape[0]
    out_dtype = x2d.dtype

    compute_dtype = jnp.bfloat16 if use_bf16 else x2d.dtype
    x_in = x2d.astype(compute_dtype)
    w1_in = w1.astype(compute_dtype)
    b1_in = jnp.reshape(b1, (1, hidden_dim)).astype(jnp.float32)

    x_bytes = jnp.dtype(compute_dtype).itemsize
    out_bytes = jnp.dtype(out_dtype).itemsize

    def compiler_params(vmem_limit):
        return pltpu.CompilerParams(
            dimension_semantics=("parallel",),       # rows shard across TCs on v7x
            vmem_limit_bytes=vmem_limit,
        )

    def x_spec(tm):
        return pl.BlockSpec((tm, input_dim), lambda i: (i, 0))

    if not has_fc:
        tm, vmem_limit = _plan_tiles(n, input_dim, hidden_dim, hidden_dim,
                                     x_bytes, out_bytes)
        return pl.pallas_call(
            _mlp_nofc_kernel,
            out_shape=jax.ShapeDtypeStruct((n, hidden_dim), out_dtype),
            grid=(pl.cdiv(n, tm),),
            in_specs=[x_spec(tm),
                      _resident((input_dim, hidden_dim)),
                      _resident((1, hidden_dim))],
            out_specs=pl.BlockSpec((tm, hidden_dim), lambda i: (i, 0)),
            compiler_params=compiler_params(vmem_limit),
        )(x_in, w1_in, b1_in)

    out_dim = w2.shape[1]
    if out_dim == 1:
        # Head weights as a (1, H) f32 lane row, bias as an SMEM scalar.
        w2_row = jnp.reshape(w2, (1, hidden_dim)).astype(jnp.float32)
        b2_s = jnp.reshape(b2, (1, 1)).astype(jnp.float32)
        tm, vmem_limit = _plan_tiles(n, input_dim, hidden_dim, 1, x_bytes, out_bytes)
        return pl.pallas_call(
            _mlp_fc1_kernel,
            out_shape=jax.ShapeDtypeStruct((n, 1), out_dtype),
            grid=(pl.cdiv(n, tm),),
            in_specs=[x_spec(tm),
                      _resident((input_dim, hidden_dim)),
                      _resident((1, hidden_dim)),
                      _resident((1, hidden_dim)),
                      pl.BlockSpec(memory_space=pltpu.MemorySpace.SMEM)],
            out_specs=pl.BlockSpec((tm, 1), lambda i: (i, 0)),
            compiler_params=compiler_params(vmem_limit),
        )(x_in, w1_in, b1_in, w2_row, b2_s)

    # General out_dim: MXU head with the true out_dim columns (full-extent
    # trailing block dim -> no padding, no post-kernel slice).
    w2_in = w2.astype(compute_dtype)
    b2_in = jnp.reshape(b2, (1, out_dim)).astype(jnp.float32)
    tm, vmem_limit = _plan_tiles(n, input_dim, hidden_dim, out_dim, x_bytes, out_bytes)
    return pl.pallas_call(
        _mlp_fc_kernel,
        out_shape=jax.ShapeDtypeStruct((n, out_dim), out_dtype),
        grid=(pl.cdiv(n, tm),),
        in_specs=[x_spec(tm),
                  _resident((input_dim, hidden_dim)),
                  _resident((1, hidden_dim)),
                  _resident((hidden_dim, out_dim)),
                  _resident((1, out_dim))],
        out_specs=pl.BlockSpec((tm, out_dim), lambda i: (i, 0)),
        compiler_params=compiler_params(vmem_limit),
    )(x_in, w1_in, b1_in, w2_in, b2_in)


# ----------------------------- init & test -----------------------------------


def init_mlp_params(key, input_dim, hidden_dim, has_fc=True):
    """Deterministic PyTorch-like init. Weights stored transposed (in, out)."""
    k1, k2, k3, k4 = jax.random.split(key, 4)
    bound1 = 1.0 / jnp.sqrt(input_dim)
    w1 = jax.random.uniform(k1, (input_dim, hidden_dim), jnp.float32, -bound1, bound1)
    b1 = jax.random.uniform(k2, (1, hidden_dim), jnp.float32, -bound1, bound1)
    if has_fc:
        out_dim = int(has_fc)  # nn.Linear(hidden_dim, has_fc): True -> 1 output
        bound2 = 1.0 / jnp.sqrt(hidden_dim)
        w2 = jax.random.uniform(k3, (hidden_dim, out_dim), jnp.float32, -bound2, bound2)
        b2 = jax.random.uniform(k4, (1, out_dim), jnp.float32, -bound2, bound2)
    else:
        w2 = b2 = None
    return (w1, b1, w2, b2)


if __name__ == "__main__":
    # Small image-like input, NCHW as in PyTorch: (batch=2, channels=4, 16, 16).
    batch, channels, spatial = 2, 4, 16
    input_dim = channels * spatial * spatial        # 1024
    hidden_dim = 32
    has_fc = True                                   # default: fc = nn.Linear(hidden_dim, 1)

    _resident_single_buffer_ok()                    # warm the feature probe outside any trace

    key = jax.random.PRNGKey(0)
    kx, kp = jax.random.split(key)
    x = jax.random.normal(kx, (batch, channels, spatial, spatial), jnp.float32)
    params = init_mlp_params(kp, input_dim, hidden_dim, has_fc)
    w1, b1, w2, b2 = params

    # Pure-JAX reference.
    h_ref = jnp.maximum(x.reshape(-1, input_dim) @ w1 + b1, 0.0)
    ref = h_ref @ w2 + b2

    # 1) default path: has_fc=True -> (N, 1), f32 (PyTorch-exact numerics)
    out = jax.block_until_ready(mlp_forward(x, params, has_fc=bool(has_fc)))
    assert out.shape == ref.shape == (batch, 1), (out.shape, ref.shape)
    assert jnp.allclose(out, ref, atol=1e-4, rtol=1e-4), float(jnp.max(jnp.abs(out - ref)))

    # 2) has_fc=False path -> relu(linear(x)), shape (N, hidden_dim)
    out_nofc = jax.block_until_ready(
        mlp_forward(x, (w1, b1, None, None), has_fc=False))
    assert out_nofc.shape == h_ref.shape, (out_nofc.shape, h_ref.shape)
    assert jnp.allclose(out_nofc, h_ref, atol=1e-4, rtol=1e-4)

    # 3) integer has_fc (e.g. 10) -> MXU head with true out_dim columns
    params10 = init_mlp_params(kp, input_dim, hidden_dim, has_fc=10)
    w1b, b1b, w2b, b2b = params10
    ref10 = jnp.maximum(x.reshape(-1, input_dim) @ w1b + b1b, 0.0) @ w2b + b2b
    out10 = jax.block_until_ready(mlp_forward(x, params10, has_fc=10))
    assert out10.shape == ref10.shape == (batch, 10), (out10.shape, ref10.shape)
    assert jnp.allclose(out10, ref10, atol=1e-4, rtol=1e-4)

    # 4) bf16 fast path (halves x HBM traffic; f32 accumulation in-kernel)
    out_bf16 = jax.block_until_ready(
        mlp_forward(x, params, has_fc=bool(has_fc), use_bf16=True))
    assert out_bf16.shape == ref.shape
    assert jnp.allclose(out_bf16, ref, atol=5e-2, rtol=5e-2), \
        float(jnp.max(jnp.abs(out_bf16 - ref)))

    print("KERNEL_OK")
</pallas_src>

<mosaic_0001>
module attributes {stable_mosaic.version = 11 : i64} {
  func.func @probe(%arg0: i32, %arg1: memref<8x128xf32, #tpu.memory_space<vmem>>, %arg2: memref<8x128xf32, #tpu.memory_space<vmem>>, %arg3: memref<8x128xf32, #tpu.memory_space<vmem>>) attributes {dimension_semantics = [#tpu.dimension_semantics<arbitrary>], iteration_bounds = array<i64: 2>, scalar_prefetch = 0 : i64, scratch_operands = 0 : i64, tpu.core_type = #tpu.core_type<tc>, window_params = [{transform_indices = @transform_0, window_bounds = array<i64: 8, 128>}, {pipeline_mode = #tpu.pipeline_mode<synchronous>, transform_indices = @transform_1, window_bounds = array<i64: 8, 128>}, {transform_indices = @transform_2, window_bounds = array<i64: 8, 128>}]} {
    %c0 = arith.constant 0 : index
    %c0_0 = arith.constant 0 : index
    %0 = vector.load %arg1[%c0, %c0_0] : memref<8x128xf32, #tpu.memory_space<vmem>>, vector<8x128xf32>
    %c0_1 = arith.constant 0 : index
    %c0_2 = arith.constant 0 : index
    %1 = vector.load %arg2[%c0_1, %c0_2] : memref<8x128xf32, #tpu.memory_space<vmem>>, vector<8x128xf32>
    %2 = arith.addf %0, %1 : vector<8x128xf32>
    %c0_3 = arith.constant 0 : index
    %c0_4 = arith.constant 0 : index
    %3 = vector.load %arg3[%c0_3, %c0_4] : memref<8x128xf32, #tpu.memory_space<vmem>>, vector<8x128xf32>
    tpu.vector_store %arg3[%c0_3, %c0_4], %2 {strides = array<i32>} : memref<8x128xf32, #tpu.memory_space<vmem>>, vector<8x128xf32>,
    return
  }
  func.func @transform_0(%arg0: i32) -> (i32, i32) {
    %c0_i32 = arith.constant 0 : i32
    %c0_i32_0 = arith.constant 0 : i32
    return %arg0, %c0_i32 : i32, i32
  }
  func.func @transform_1(%arg0: i32) -> (i32, i32) {
    %c0_i32 = arith.constant 0 : i32
    %c0_i32_0 = arith.constant 0 : i32
    %c0_i32_1 = arith.constant 0 : i32
    return %c0_i32, %c0_i32_0 : i32, i32
  }
  func.func @transform_2(%arg0: i32) -> (i32, i32) {
    %c0_i32 = arith.constant 0 : i32
    %c0_i32_0 = arith.constant 0 : i32
    return %arg0, %c0_i32 : i32, i32
  }
}

module attributes {stable_mosaic.version = 11 : i64} {
  func.func @_mlp_fc1_kernel(%arg0: i32, %arg1: memref<2x1024xf32, #tpu.memory_space<vmem>>, %arg2: memref<1024x32xf32, #tpu.memory_space<vmem>>, %arg3: memref<1x32xf32, #tpu.memory_space<vmem>>, %arg4: memref<1x32xf32, #tpu.memory_space<vmem>>, %arg5: memref<1x1xf32, #tpu.memory_space<smem>>, %arg6: memref<2x1xf32, #tpu.memory_space<vmem>>) attributes {dimension_semantics = [#tpu.dimension_semantics<parallel>], iteration_bounds = array<i64: 1>, scalar_prefetch = 0 : i64, scratch_operands = 0 : i64, tpu.core_type = #tpu.core_type<tc>, window_params = [{transform_indices = @transform_0, window_bounds = array<i64: 2, 1024>}, {pipeline_mode = #tpu.pipeline_mode<synchronous>, transform_indices = @transform_1, window_bounds = array<i64: 1024, 32>}, {pipeline_mode = #tpu.pipeline_mode<synchronous>, transform_indices = @transform_2, window_bounds = array<i64: 1, 32>}, {pipeline_mode = #tpu.pipeline_mode<synchronous>, transform_indices = @transform_3, window_bounds = array<i64: 1, 32>}, {transform_indices = @transform_4, window_bounds = array<i64: 1, 1>}, {transform_indices = @transform_5, window_bounds = array<i64: 2, 1>}]} {
    %c0 = arith.constant 0 : index
    %c0_0 = arith.constant 0 : index
    %0 = vector.load %arg1[%c0, %c0_0] : memref<2x1024xf32, #tpu.memory_space<vmem>>, vector<2x1024xf32>
    %c0_1 = arith.constant 0 : index
    %c0_2 = arith.constant 0 : index
    %1 = vector.load %arg2[%c0_1, %c0_2] : memref<1024x32xf32, #tpu.memory_space<vmem>>, vector<1024x32xf32>
    %cst = arith.constant dense<0.000000e+00> : vector<2x32xf32>
    %2 = tpu.matmul %0, %1, %cst {dimension_numbers = #tpu.dot_dimension_numbers<[1], [0], [0], [1], [0, 0, 1, 1], [], []>} : vector<2x1024xf32>, vector<1024x32xf32>, vector<2x32xf32> -> vector<2x32xf32>
    %c0_3 = arith.constant 0 : index
    %c0_4 = arith.constant 0 : index
    %3 = vector.load %arg3[%c0_3, %c0_4] : memref<1x32xf32, #tpu.memory_space<vmem>>, vector<1x32xf32>
    %4 = vector.broadcast %3 : vector<1x32xf32> to vector<2x32xf32>
    %5 = arith.addf %2, %4 : vector<2x32xf32>
    %cst_5 = arith.constant 0.000000e+00 : f32
    %6 = vector.broadcast %cst_5 : f32 to vector<2x32xf32>
    %7 = arith.maximumf %5, %6 : vector<2x32xf32>
    %c0_6 = arith.constant 0 : index
    %c0_7 = arith.constant 0 : index
    %8 = vector.load %arg4[%c0_6, %c0_7] : memref<1x32xf32, #tpu.memory_space<vmem>>, vector<1x32xf32>
    %9 = vector.broadcast %8 : vector<1x32xf32> to vector<2x32xf32>
    %10 = arith.mulf %7, %9 : vector<2x32xf32>
    %cst_8 = arith.constant dense<0.000000e+00> : vector<2xf32>
    %11 = vector.multi_reduction <add>, %10, %cst_8 [1] : vector<2x32xf32> to vector<2xf32>
    %12 = vector.shape_cast %11 : vector<2xf32> to vector<2x1xf32>
    %c0_9 = arith.constant 0 : index
    %c0_10 = arith.constant 0 : index
    %13 = memref.load %arg5[%c0_9, %c0_10] : memref<1x1xf32, #tpu.memory_space<smem>>
    %14 = vector.broadcast %13 : f32 to vector<2x1xf32>
    %15 = arith.addf %12, %14 : vector<2x1xf32>
    %c0_11 = arith.constant 0 : index
    %c0_12 = arith.constant 0 : index
    %16 = vector.load %arg6[%c0_11, %c0_12] : memref<2x1xf32, #tpu.memory_space<vmem>>, vector<2x1xf32>
    tpu.vector_store %arg6[%c0_11, %c0_12], %15 {strides = array<i32>} : memref<2x1xf32, #tpu.memory_space<vmem>>, vector<2x1xf32>,
    return
  }
  func.func @transform_0(%arg0: i32) -> (i32, i32) {
    %c0_i32 = arith.constant 0 : i32
    %c0_i32_0 = arith.constant 0 : i32
    return %arg0, %c0_i32 : i32, i32
  }
  func.func @transform_1(%arg0: i32) -> (i32, i32) {
    %c0_i32 = arith.constant 0 : i32
    %c0_i32_0 = arith.constant 0 : i32
    %c0_i32_1 = arith.constant 0 : i32
    return %c0_i32, %c0_i32_0 : i32, i32
  }
  func.func @transform_2(%arg0: i32) -> (i32, i32) {
    %c0_i32 = arith.constant 0 : i32
    %c0_i32_0 = arith.constant 0 : i32
    %c0_i32_1 = arith.constant 0 : i32
    return %c0_i32, %c0_i32_0 : i32, i32
  }
  func.func @transform_3(%arg0: i32) -> (i32, i32) {
    %c0_i32 = arith.constant 0 : i32
    %c0_i32_0 = arith.constant 0 : i32
    %c0_i32_1 = arith.constant 0 : i32
    return %c0_i32, %c0_i32_0 : i32, i32
  }
  func.func @transform_4(%arg0: i32) -> (i32, i32) {
    %c0_i32 = arith.constant 0 : i32
    %c0_i32_0 = arith.constant 0 : i32
    %c0_i32_1 = arith.constant 0 : i32
    return %c0_i32, %c0_i32_0 : i32, i32
  }
  func.func @transform_5(%arg0: i32) -> (i32, i32) {
    %c0_i32 = arith.constant 0 : i32
    %c0_i32_0 = arith.constant 0 : i32
    return %arg0, %c0_i32 : i32, i32
  }
}

</mosaic_0001>

<llo_original>
// kernel: tpu_custom_call.1
$region0: #{tpu_custom_call.1}
  #allocation0 [shape = 'u32[]', space=smem, size = 0x4, offset = 0x4, fixed_abs, tag = 'smem constant byte address 0x4 - core index']
  #allocation1 [shape = 'u32[144,128]{1,0:T(1,128)}', space=vmem, size = 0x12000, scoped, tag = 'internal scratch']
  %s0 = inlined_call_operand.hbm [shape: f32[16,128], index: 0, kind: input, shape index: {}]
  %s1 = inlined_call_operand.hbm [shape: f32[8,128], index: 1, kind: input, shape index: {}]
  %s2 = inlined_call_operand.hbm [shape: f32[16,128], index: 2, kind: output, shape index: {}]
  %s3 = sld [smem:[#allocation0]]
  $region49: #{tpu_custom_call.1} parent=0
    _
  %s5 = ssub.s32 1, %s3
  %s6 = scalar_select 0, %s5, %s3
  $region1: #{tpu_custom_call.1} parent=0
    #allocation2 [shape = 'u8[8192]{0}', space=vmem, size = 0x2000, scoped, tag = 'input window, operand 0']
    #allocation3 [shape = 's32[2]{0}', space=sflag, size = 0x8, scoped, tag = 'scoped memory for tpu_custom_call.1']
    #allocation4 [shape = 's32[2]{0}', space=sflag, size = 0x8, scoped, tag = 'scoped memory for tpu_custom_call.1']
    #allocation5 [shape = 'u8[4096]{0}', space=vmem, size = 0x1000, scoped, tag = 'input window, operand 1, single buffered']
    #allocation6 [shape = 's32[1]{0}', space=sflag, size = 0x4, scoped, tag = 'scoped memory for tpu_custom_call.1']
    #allocation7 [shape = 'u8[8192]{0}', space=vmem, size = 0x2000, scoped, tag = 'output window, operand 0']
    %7 = vsyncpa [#allocation3], 0
    %s8 = scalar_lea.sflag [#allocation3], 1
    %9 = vsyncpa %s8, 0
    %10 = vsyncpa [#allocation6], 0
    %11 = vsyncpa [#allocation4], 0
    %s12 = scalar_lea.sflag [#allocation4], 1
    %13 = vsyncpa %s12, 0
    loop: start=0, step=1, limit=4
    $region2: #{tpu_custom_call.1} parent=1 // loop_pre_header
      _
    $region3: #{tpu_custom_call.1} parent=1 // loop_header
      %s15 = sphi 0, %s19
      %p16 = scmp.ge.s32.totalorder %s15, 4
      %s25 = sphi 0, %s27
      %s28 = sphi 0, %s25
      %s29 = sphi 0, %s28
      %s45 = sphi 0, %s29
      %s49 = sphi 0, %s49
      %s51 = sphi 0, %s49
      %s52 = sphi 0, %s51
      %s66 = sphi 0, %s52
      %s72 = sphi 0, %s74
      %s75 = sphi 0, %s72
      %s76 = sphi 0, %s75
      %s92 = sphi 0, %s76
    $region4: #{tpu_custom_call.1} parent=1 // loop_header_branch
      %18 = sbr.rel (%p16) target = $region8
    $region5: #{tpu_custom_call.1} parent=1 // loop_body
      %s20 = ssub.s32 %s15, 1
      %s21 = ssub.s32 %s15, 2
      %s22 = sadd.s32 %s15, 1
      %s23 = ssub.s32 %s15, %s22
      %p24 = scmp.eq.s32.totalorder %s23, 0
      %s26 = sadd.s32 %s25, 1
      %s27 = scalar_select %p24, %s25, %s26
      %p30 = pneg %p24
      %p31 = scmp.eq.s32.totalorder %s15, 1
      %p32 = por %p30, %p31
      %p33 = scmp.ne.s32.totalorder %s25, %s28
      %p34 = scmp.eq.s32.totalorder %s15, 0
      %p35 = por %p33, %p34
      %p36 = scmp.ne.s32.totalorder %s25, %s28
      %p37 = scmp.eq.s32.totalorder %s20, 1
      %p38 = por %p36, %p37
      %p39 = scmp.ne.s32.totalorder %s28, %s29
      %p40 = scmp.eq.s32.totalorder %s20, 0
      %p41 = por %p39, %p40
      %p42 = scmp.ne.s32.totalorder %s28, %s29
      %p43 = scmp.eq.s32.totalorder %s21, 1
      %p44 = por %p42, %p43
      %p46 = scmp.ne.s32.totalorder %s29, %s45
      %p47 = scmp.eq.s32.totalorder %s21, 0
      %p48 = por %p46, %p47
      %s50 = sadd.s32 %s49, 1
      %p53 = scmp.eq.s32.totalorder %s15, 1
      %p54 = scmp.ne.s32.totalorder %s49, %s51
      %p55 = scmp.eq.s32.totalorder %s15, 0
      %p56 = por %p54, %p55
      %p57 = scmp.ne.s32.totalorder %s49, %s51
      %p58 = scmp.eq.s32.totalorder %s20, 1
      %p59 = por %p57, %p58
      %p60 = scmp.ne.s32.totalorder %s51, %s52
      %p61 = scmp.eq.s32.totalorder %s20, 0
      %p62 = por %p60, %p61
      %p63 = scmp.ne.s32.totalorder %s51, %s52
      %p64 = scmp.eq.s32.totalorder %s21, 1
      %p65 = por %p63, %p64
      %p67 = scmp.ne.s32.totalorder %s52, %s66
      %p68 = scmp.eq.s32.totalorder %s21, 0
      %p69 = por %p67, %p68
      %s70 = ssub.s32 %s15, %s22
      %p71 = scmp.eq.s32.totalorder %s70, 0
      %s73 = sadd.s32 %s72, 1
      %s74 = scalar_select %p71, %s72, %s73
      %p77 = pneg %p71
      %p78 = scmp.eq.s32.totalorder %s15, 1
      %p79 = por %p77, %p78
      %p80 = scmp.ne.s32.totalorder %s72, %s75
      %p81 = scmp.eq.s32.totalorder %s15, 0
      %p82 = por %p80, %p81
      %p83 = scmp.ne.s32.totalorder %s72, %s75
      %p84 = scmp.eq.s32.totalorder %s20, 1
      %p85 = por %p83, %p84
      %p86 = scmp.ne.s32.totalorder %s75, %s76
      %p87 = scmp.eq.s32.totalorder %s20, 0
      %p88 = por %p86, %p87
      %p89 = scmp.ne.s32.totalorder %s75, %s76
      %p90 = scmp.eq.s32.totalorder %s21, 1
      %p91 = por %p89, %p90
      %p93 = scmp.ne.s32.totalorder %s76, %s92
      %p94 = scmp.eq.s32.totalorder %s21, 0
      %p95 = por %p93, %p94
      %p96 = scmp.le.s32.totalorder 1, %s15
      %p97 = scmp.lt.s32.totalorder %s15, 3
      %p98 = pnand %p96, %p97
      %p99 = pneg %p98
      // Predicated region
      $region9: #{tpu_custom_call.1} parent=5 // pred_check
        _
      $region10: #{tpu_custom_call.1} parent=5 // pred_check_branch
        %101 = sbr.rel (%p98) target = $region12
      $region11: #{tpu_custom_call.1} parent=5 // pred_region
        %s102 = ssub.s32 %s15, 1
        // Predicated region
        $region13: #{tpu_custom_call.1} parent=11 // pred_check
          %p103 = pneg %p62
        $region14: #{tpu_custom_call.1} parent=11 // pred_check_branch
          %105 = sbr.rel (%p103) target = $region16
        $region15: #{tpu_custom_call.1} parent=11 // pred_region
          %s107 = ssub.s32 128, 128
          %108 = vsyncadd [#allocation6], %s107
          %s110 = sshll.u32 [#allocation5], 4
          %s111 = int_to_ptr.vmem [resolvable:$true] %s110
          %113 = dma.hbm_to_vmem [thread:$0]  %s1, 128, %s111, [#allocation6]
        $region16: #{tpu_custom_call.1} parent=11 // pred_fallthru
          _
      $region12: #{tpu_custom_call.1} parent=5 // pred_fallthru
        _
      %p114 = scmp.lt.s32.totalorder %s15, 2
      // Predicated region
      $region17: #{tpu_custom_call.1} parent=5 // pred_check
        %p115 = pneg %p114
      $region18: #{tpu_custom_call.1} parent=5 // pred_check_branch
        %117 = sbr.rel (%p115) target = $region20
      $region19: #{tpu_custom_call.1} parent=5 // pred_region
        // Predicated region
        $region21: #{tpu_custom_call.1} parent=19 // pred_check
          %p118 = pneg %p35
        $region22: #{tpu_custom_call.1} parent=19 // pred_check_branch
          %120 = sbr.rel (%p118) target = $region24
        $region23: #{tpu_custom_call.1} parent=19 // pred_region
          %s121 = sand.u32 %s25, 1
          %s122 = scalar_lea.sflag [#allocation3], %s121
          %s123 = sand.u32 %s25, 1
          %s124 = smul.addr %s123, 8
          %s125 = scalar_lea.vmem [#allocation2], %s124
          %s127 = ssub.s32 128, 128
          %128 = vsyncadd %s122, %s127
          %s129 = smul.addr %s15, 128
          %s130 = scalar_lea.hbm %s0, %s129
          %s132 = sshll.u32 %s125, 4
          %s133 = int_to_ptr.vmem [resolvable:$true] %s132
          %135 = dma.hbm_to_vmem [thread:$0]  %s130, 128, %s133, %s122
        $region24: #{tpu_custom_call.1} parent=19 // pred_fallthru
          _
      $region20: #{tpu_custom_call.1} parent=5 // pred_fallthru
        _
      %p136 = scmp.le.s32.totalorder 1, %s15
      %p137 = scmp.lt.s32.totalorder %s15, 3
      %p138 = pnand %p136, %p137
      %p139 = pneg %p138
      // Predicated region
      $region25: #{tpu_custom_call.1} parent=5 // pred_check
        _
      $region26: #{tpu_custom_call.1} parent=5 // pred_check_branch
        %141 = sbr.rel (%p138) target = $region28
      $region27: #{tpu_custom_call.1} parent=5 // pred_region
        %s142 = ssub.s32 %s15, 1
        %s143 = sand.u32 %s28, 1
        %s144 = scalar_lea.sflag [#allocation3], %s143
        %s145 = sand.u32 %s28, 1
        %s146 = smul.addr %s145, 8
        %s147 = scalar_lea.vmem [#allocation2], %s146
        // Predicated region
        $region29: #{tpu_custom_call.1} parent=27 // pred_check
          %p148 = pneg %p41
        $region30: #{tpu_custom_call.1} parent=27 // pred_check_branch
          %150 = sbr.rel (%p148) target = $region32
        $region31: #{tpu_custom_call.1} parent=27 // pred_region
          %151 = dma.done %s144, 128
        $region32: #{tpu_custom_call.1} parent=27 // pred_fallthru
          _
        // Predicated region
        $region33: #{tpu_custom_call.1} parent=27 // pred_check
          %p152 = pneg %p62
        $region34: #{tpu_custom_call.1} parent=27 // pred_check_branch
          %154 = sbr.rel (%p152) target = $region36
        $region35: #{tpu_custom_call.1} parent=27 // pred_region
          %155 = dma.done [#allocation6], 128
        $region36: #{tpu_custom_call.1} parent=27 // pred_fallthru
          _
        %s156 = sand.u32 %s28, 1
        %s157 = scalar_lea.sflag [#allocation3], %s156
        %s158 = sand.u32 %s28, 1
        %s159 = smul.addr %s158, 8
        %s160 = scalar_lea.vmem [#allocation2], %s159
        %p161 = pneg %p41
        %p162 = pneg %p38
        %p163 = pneg %p62
        %p164 = pneg %p59
        %p165 = pneg %p88
        %p166 = pneg %p85
        %s167 = sand.u32 %s75, 1
        %s168 = scalar_lea.sflag [#allocation4], %s167
        %s169 = sand.u32 %s75, 1
        %s170 = smul.addr %s169, 8
        %s171 = scalar_lea.vmem [#allocation7], %s170
        %v172 = vld [vmem:[%s147] sm:$0xff]
        %v173 = vld [vmem:[#allocation5] sm:$0xff]
        %v174 = vadd.f32 %v172, %v173
        %175 = vst [vmem:[%s171] sm:$0xff] %v174
        %s176 = sand.u32 %s75, 1
        %s177 = scalar_lea.sflag [#allocation4], %s176
        %s178 = sand.u32 %s75, 1
        %s179 = smul.addr %s178, 8
        %s180 = scalar_lea.vmem [#allocation7], %s179
        // Predicated region
        $region37: #{tpu_custom_call.1} parent=27 // pred_check
          %p181 = pneg %p85
        $region38: #{tpu_custom_call.1} parent=27 // pred_check_branch
          %183 = sbr.rel (%p181) target = $region40
        $region39: #{tpu_custom_call.1} parent=27 // pred_region
          %s185 = ssub.s32 128, 128
          %186 = vsyncadd %s177, %s185
          %s187 = smul.addr %s20, 128
          %s188 = scalar_lea.hbm %s2, %s187
          %s190 = sshll.u32 %s180, 4
          %s191 = int_to_ptr.vmem [resolvable:$true] %s190
          %193 = dma.vmem_to_hbm [thread:$0]  %s191, 128, %s188, %s177
        $region40: #{tpu_custom_call.1} parent=27 // pred_fallthru
          _
      $region28: #{tpu_custom_call.1} parent=5 // pred_fallthru
        _
      %p194 = scmp.le.s32.totalorder 2, %s15
      // Predicated region
      $region41: #{tpu_custom_call.1} parent=5 // pred_check
        %p195 = pneg %p194
      $region42: #{tpu_custom_call.1} parent=5 // pred_check_branch
        %197 = sbr.rel (%p195) target = $region44
      $region43: #{tpu_custom_call.1} parent=5 // pred_region
        %s198 = ssub.s32 %s15, 2
        // Predicated region
        $region45: #{tpu_custom_call.1} parent=43 // pred_check
          %p199 = pneg %p91
        $region46: #{tpu_custom_call.1} parent=43 // pred_check_branch
          %201 = sbr.rel (%p199) target = $region48
        $region47: #{tpu_custom_call.1} parent=43 // pred_region
          %s202 = sand.u32 %s76, 1
          %s203 = scalar_lea.sflag [#allocation4], %s202
          %s204 = sand.u32 %s76, 1
          %s205 = smul.addr %s204, 8
          %s206 = scalar_lea.vmem [#allocation7], %s205
          %207 = dma.done %s203, 128
        $region48: #{tpu_custom_call.1} parent=43 // pred_fallthru
          _
      $region44: #{tpu_custom_call.1} parent=5 // pred_fallthru
        _
    $region6: #{tpu_custom_call.1} parent=1 // loop_footer
      %s19 = sadd.s32 1, %s15
    $region7: #{tpu_custom_call.1} parent=1 // loop_footer_branch
      %14 = sbr.rel target = $region3
    $region8: #{tpu_custom_call.1} parent=1 // loop_exit
      _
    %208 = vsyncpa [#allocation3], 1
    %s209 = scalar_lea.sflag [#allocation3], 1
    %210 = vsyncpa %s209, 1
    %211 = vsyncpa [#allocation6], 1
    %212 = vsyncpa [#allocation4], 1
    %s213 = scalar_lea.sflag [#allocation4], 1
    %214 = vsyncpa %s213, 1

// kernel: mlp_forward.1
$region0: #{mlp_forward.1}
  #allocation0 [shape = 'u32[]', space=smem, size = 0x4, offset = 0x4, fixed_abs, tag = 'smem constant byte address 0x4 - core index']
  #allocation1 [shape = 'u32[144,128]{1,0:T(1,128)}', space=vmem, size = 0x12000, scoped, tag = 'internal scratch']
  #allocation2 [shape = 'f32[1,1]{1,0:T(1,128)S(6)}', space=smem, size = 0x200, scoped, tag = 'scoped memory for mlp_forward.1']
  %s0 = inlined_call_operand.vmem [shape: f32[2,1024], index: 0, kind: input, shape index: {}]
  %s1 = inlined_call_operand.vmem [shape: f32[1024,32], index: 1, kind: input, shape index: {}]
  %s2 = inlined_call_operand.vmem [shape: f32[1,32], index: 2, kind: input, shape index: {}]
  %s3 = inlined_call_operand.vmem [shape: f32[1,32], index: 3, kind: input, shape index: {}]
  %s4 = inlined_call_operand.<no memory space> [shape: f32[1,1], index: 4, kind: input, shape index: {}]
  %s5 = inlined_call_operand.vmem [shape: f32[2,1], index: 5, kind: output, shape index: {}]
  %s6 = sld [smem:[#allocation0]]
  $region30: #{mlp_forward.1} parent=0
    _
  %s8 = ssub.s32 1, %s6
  %s9 = scalar_select 0, %s8, %s6
  %10 = sst [smem:[#allocation2]] %s4
  // Predicated region
  $region2: #{mlp_forward.1} parent=0 // pred_check
    _
  $region3: #{mlp_forward.1} parent=0 // pred_check_branch
    %12 = sbr.rel (0) target = $region5
  $region4: #{mlp_forward.1} parent=0 // pred_region
    _
  $region5: #{mlp_forward.1} parent=0 // pred_fallthru
    _
  // Predicated region
  $region6: #{mlp_forward.1} parent=0 // pred_check
    _
  $region7: #{mlp_forward.1} parent=0 // pred_check_branch
    %14 = sbr.rel (0) target = $region9
  $region8: #{mlp_forward.1} parent=0 // pred_region
    _
  $region9: #{mlp_forward.1} parent=0 // pred_fallthru
    _
  // Predicated region
  $region10: #{mlp_forward.1} parent=0 // pred_check
    _
  $region11: #{mlp_forward.1} parent=0 // pred_check_branch
    %16 = sbr.rel (0) target = $region13
  $region12: #{mlp_forward.1} parent=0 // pred_region
    _
  $region13: #{mlp_forward.1} parent=0 // pred_fallthru
    _
  // Predicated region
  $region14: #{mlp_forward.1} parent=0 // pred_check
    _
  $region15: #{mlp_forward.1} parent=0 // pred_check_branch
    %18 = sbr.rel (0) target = $region17
  $region16: #{mlp_forward.1} parent=0 // pred_region
    _
  $region17: #{mlp_forward.1} parent=0 // pred_fallthru
    _
  // Predicated region
  $region18: #{mlp_forward.1} parent=0 // pred_check
    _
  $region19: #{mlp_forward.1} parent=0 // pred_check_branch
    %20 = sbr.rel (0) target = $region21
  $region20: #{mlp_forward.1} parent=0 // pred_region
    _
  $region21: #{mlp_forward.1} parent=0 // pred_fallthru
    _
  %v21 = vld [vmem:[%s0] sm:$0xff]
  %v22 = vld [vmem:[%s0 + $0x8] sm:$0xff]
  %v23 = vld [vmem:[%s1] sm:$0xff]
  %v24 = vld [vmem:[%s1 + $0x8] sm:$0xff]
  %v25 = vld [vmem:[%s1 + $0x10] sm:$0xff]
  %v26 = vld [vmem:[%s1 + $0x18] sm:$0xff]
  %v27 = vld [vmem:[%s1 + $0x20] sm:$0xff]
  %v28 = vld [vmem:[%s1 + $0x28] sm:$0xff]
  %v29 = vld [vmem:[%s1 + $0x30] sm:$0xff]
  %v30 = vld [vmem:[%s1 + $0x38] sm:$0xff]
  %v31 = vld [vmem:[%s1 + $0x40] sm:$0xff]
  %v32 = vld [vmem:[%s1 + $0x48] sm:$0xff]
  %v33 = vld [vmem:[%s1 + $0x50] sm:$0xff]
  %v34 = vld [vmem:[%s1 + $0x58] sm:$0xff]
  %v35 = vld [vmem:[%s1 + $0x60] sm:$0xff]
  %v36 = vld [vmem:[%s1 + $0x68] sm:$0xff]
  %v37 = vld [vmem:[%s1 + $0x70] sm:$0xff]
  %v38 = vld [vmem:[%s1 + $0x78] sm:$0xff]
  %v39 = vld [vmem:[%s1 + $0x80] sm:$0xff]
  %v40 = vld [vmem:[%s1 + $0x88] sm:$0xff]
  %v41 = vld [vmem:[%s1 + $0x90] sm:$0xff]
  %v42 = vld [vmem:[%s1 + $0x98] sm:$0xff]
  %v43 = vld [vmem:[%s1 + $0xa0] sm:$0xff]
  %v44 = vld [vmem:[%s1 + $0xa8] sm:$0xff]
  %v45 = vld [vmem:[%s1 + $0xb0] sm:$0xff]
  %v46 = vld [vmem:[%s1 + $0xb8] sm:$0xff]
  %v47 = vld [vmem:[%s1 + $0xc0] sm:$0xff]
  %v48 = vld [vmem:[%s1 + $0xc8] sm:$0xff]
  %v49 = vld [vmem:[%s1 + $0xd0] sm:$0xff]
  %v50 = vld [vmem:[%s1 + $0xd8] sm:$0xff]
  %v51 = vld [vmem:[%s1 + $0xe0] sm:$0xff]
  %v52 = vld [vmem:[%s1 + $0xe8] sm:$0xff]
  %v53 = vld [vmem:[%s1 + $0xf0] sm:$0xff]
  %v54 = vld [vmem:[%s1 + $0xf8] sm:$0xff]
  %v55 = vld [vmem:[%s1 + $0x100] sm:$0xff]
  %v56 = vld [vmem:[%s1 + $0x108] sm:$0xff]
  %v57 = vld [vmem:[%s1 + $0x110] sm:$0xff]
  %v58 = vld [vmem:[%s1 + $0x118] sm:$0xff]
  %v59 = vld [vmem:[%s1 + $0x120] sm:$0xff]
  %v60 = vld [vmem:[%s1 + $0x128] sm:$0xff]
  %v61 = vld [vmem:[%s1 + $0x130] sm:$0xff]
  %v62 = vld [vmem:[%s1 + $0x138] sm:$0xff]
  %v63 = vld [vmem:[%s1 + $0x140] sm:$0xff]
  %v64 = vld [vmem:[%s1 + $0x148] sm:$0xff]
  %v65 = vld [vmem:[%s1 + $0x150] sm:$0xff]
  %v66 = vld [vmem:[%s1 + $0x158] sm:$0xff]
  %v67 = vld [vmem:[%s1 + $0x160] sm:$0xff]
  %v68 = vld [vmem:[%s1 + $0x168] sm:$0xff]
  %v69 = vld [vmem:[%s1 + $0x170] sm:$0xff]
  %v70 = vld [vmem:[%s1 + $0x178] sm:$0xff]
  %v71 = vld [vmem:[%s1 + $0x180] sm:$0xff]
  %v72 = vld [vmem:[%s1 + $0x188] sm:$0xff]
  %v73 = vld [vmem:[%s1 + $0x190] sm:$0xff]
  %v74 = vld [vmem:[%s1 + $0x198] sm:$0xff]
  %v75 = vld [vmem:[%s1 + $0x1a0] sm:$0xff]
  %v76 = vld [vmem:[%s1 + $0x1a8] sm:$0xff]
  %v77 = vld [vmem:[%s1 + $0x1b0] sm:$0xff]
  %v78 = vld [vmem:[%s1 + $0x1b8] sm:$0xff]
  %v79 = vld [vmem:[%s1 + $0x1c0] sm:$0xff]
  %v80 = vld [vmem:[%s1 + $0x1c8] sm:$0xff]
  %v81 = vld [vmem:[%s1 + $0x1d0] sm:$0xff]
  %v82 = vld [vmem:[%s1 + $0x1d8] sm:$0xff]
  %v83 = vld [vmem:[%s1 + $0x1e0] sm:$0xff]
  %v84 = vld [vmem:[%s1 + $0x1e8] sm:$0xff]
  %v85 = vld [vmem:[%s1 + $0x1f0] sm:$0xff]
  %v86 = vld [vmem:[%s1 + $0x1f8] sm:$0xff]
  %v87 = vld [vmem:[%s1 + $0x200] sm:$0xff]
  %v88 = vld [vmem:[%s1 + $0x208] sm:$0xff]
  %v89 = vld [vmem:[%s1 + $0x210] sm:$0xff]
  %v90 = vld [vmem:[%s1 + $0x218] sm:$0xff]
  %v91 = vld [vmem:[%s1 + $0x220] sm:$0xff]
  %v92 = vld [vmem:[%s1 + $0x228] sm:$0xff]
  %v93 = vld [vmem:[%s1 + $0x230] sm:$0xff]
  %v94 = vld [vmem:[%s1 + $0x238] sm:$0xff]
  %v95 = vld [vmem:[%s1 + $0x240] sm:$0xff]
  %v96 = vld [vmem:[%s1 + $0x248] sm:$0xff]
  %v97 = vld [vmem:[%s1 + $0x250] sm:$0xff]
  %v98 = vld [vmem:[%s1 + $0x258] sm:$0xff]
  %v99 = vld [vmem:[%s1 + $0x260] sm:$0xff]
  %v100 = vld [vmem:[%s1 + $0x268] sm:$0xff]
  %v101 = vld [vmem:[%s1 + $0x270] sm:$0xff]
  %v102 = vld [vmem:[%s1 + $0x278] sm:$0xff]
  %v103 = vld [vmem:[%s1 + $0x280] sm:$0xff]
  %v104 = vld [vmem:[%s1 + $0x288] sm:$0xff]
  %v105 = vld [vmem:[%s1 + $0x290] sm:$0xff]
  %v106 = vld [vmem:[%s1 + $0x298] sm:$0xff]
  %v107 = vld [vmem:[%s1 + $0x2a0] sm:$0xff]
  %v108 = vld [vmem:[%s1 + $0x2a8] sm:$0xff]
  %v109 = vld [vmem:[%s1 + $0x2b0] sm:$0xff]
  %v110 = vld [vmem:[%s1 + $0x2b8] sm:$0xff]
  %v111 = vld [vmem:[%s1 + $0x2c0] sm:$0xff]
  %v112 = vld [vmem:[%s1 + $0x2c8] sm:$0xff]
  %v113 = vld [vmem:[%s1 + $0x2d0] sm:$0xff]
  %v114 = vld [vmem:[%s1 + $0x2d8] sm:$0xff]
  %v115 = vld [vmem:[%s1 + $0x2e0] sm:$0xff]
  %v116 = vld [vmem:[%s1 + $0x2e8] sm:$0xff]
  %v117 = vld [vmem:[%s1 + $0x2f0] sm:$0xff]
  %v118 = vld [vmem:[%s1 + $0x2f8] sm:$0xff]
  %v119 = vld [vmem:[%s1 + $0x300] sm:$0xff]
  %v120 = vld [vmem:[%s1 + $0x308] sm:$0xff]
  %v121 = vld [vmem:[%s1 + $0x310] sm:$0xff]
  %v122 = vld [vmem:[%s1 + $0x318] sm:$0xff]
  %v123 = vld [vmem:[%s1 + $0x320] sm:$0xff]
  %v124 = vld [vmem:[%s1 + $0x328] sm:$0xff]
  %v125 = vld [vmem:[%s1 + $0x330] sm:$0xff]
  %v126 = vld [vmem:[%s1 + $0x338] sm:$0xff]
  %v127 = vld [vmem:[%s1 + $0x340] sm:$0xff]
  %v128 = vld [vmem:[%s1 + $0x348] sm:$0xff]
  %v129 = vld [vmem:[%s1 + $0x350] sm:$0xff]
  %v130 = vld [vmem:[%s1 + $0x358] sm:$0xff]
  %v131 = vld [vmem:[%s1 + $0x360] sm:$0xff]
  %v132 = vld [vmem:[%s1 + $0x368] sm:$0xff]
  %v133 = vld [vmem:[%s1 + $0x370] sm:$0xff]
  %v134 = vld [vmem:[%s1 + $0x378] sm:$0xff]
  %v135 = vld [vmem:[%s1 + $0x380] sm:$0xff]
  %v136 = vld [vmem:[%s1 + $0x388] sm:$0xff]
  %v137 = vld [vmem:[%s1 + $0x390] sm:$0xff]
  %v138 = vld [vmem:[%s1 + $0x398] sm:$0xff]
  %v139 = vld [vmem:[%s1 + $0x3a0] sm:$0xff]
  %v140 = vld [vmem:[%s1 + $0x3a8] sm:$0xff]
  %v141 = vld [vmem:[%s1 + $0x3b0] sm:$0xff]
  %v142 = vld [vmem:[%s1 + $0x3b8] sm:$0xff]
  %v143 = vld [vmem:[%s1 + $0x3c0] sm:$0xff]
  %v144 = vld [vmem:[%s1 + $0x3c8] sm:$0xff]
  %v145 = vld [vmem:[%s1 + $0x3d0] sm:$0xff]
  %v146 = vld [vmem:[%s1 + $0x3d8] sm:$0xff]
  %v147 = vld [vmem:[%s1 + $0x3e0] sm:$0xff]
  %v148 = vld [vmem:[%s1 + $0x3e8] sm:$0xff]
  %v149 = vld [vmem:[%s1 + $0x3f0] sm:$0xff]
  %v150 = vld [vmem:[%s1 + $0x3f8] sm:$0xff]
  %v151 = vld [vmem:[%s2] sm:$0x1]
  %v153 = vlaneseq
  %v154 = vshrl.u32 %v153, 7
  %v155 = vsub.s32 0, %v154
  %v156 = vrot.slane %v151, %v155
  %v160 = vcombine.high %v21, %v21
  %v162 = vunpack.c.l.s4 1983009808
  %v163 = vunpack.c.0.s8 %v162
  %v164 = vlaneseq
  %v165 = vshrl.u32 %v164, 7
  %v166 = vsub.s32 %v163, %v165
  %v167 = vrot.slane %v21, %v166
  %v169 = vunpack.c.l.s4 1983009808
  %v170 = vunpack.c.0.s8 %v169
  %v171 = vlaneseq
  %v172 = vshrl.u32 %v171, 7
  %v173 = vsub.s32 %v170, %v172
  %v174 = vrot.slane %v160, %v173
  %v175 = vcombine.high %v167, %v167
  %v176 = vcombine.high %v174, %v174
  %v177 = vcombine.high %v22, %v22
  %v179 = vunpack.c.l.s4 1983009808
  %v180 = vunpack.c.0.s8 %v179
  %v181 = vlaneseq
  %v182 = vshrl.u32 %v181, 7
  %v183 = vsub.s32 %v180, %v182
  %v184 = vrot.slane %v22, %v183
  %v186 = vunpack.c.l.s4 1983009808
  %v187 = vunpack.c.0.s8 %v186
  %v188 = vlaneseq
  %v189 = vshrl.u32 %v188, 7
  %v190 = vsub.s32 %v187, %v189
  %v191 = vrot.slane %v177, %v190
  %v192 = vcombine.high %v184, %v184
  %v193 = vcombine.high %v191, %v191
  %202 = vmatprep.subr.mxu0 0.0
  %203 = vmatpush1.msra.mxu0 %v38
  %204 = vmatprep.subr.mxu0 0.0
  %205 = vmatpush1.msra.mxu0 %v37
  %206 = vmatprep.subr.mxu0 0.0
  %207 = vmatpush1.msra.mxu0 %v36
  %208 = vmatprep.subr.mxu0 0.0
  %209 = vmatpush1.msra.mxu0 %v35
  %210 = vmatprep.subr.mxu0 0.0
  %211 = vmatpush1.msra.mxu0 %v34
  %212 = vmatprep.subr.mxu0 0.0
  %213 = vmatpush1.msra.mxu0 %v33
  %214 = vmatprep.subr.mxu0 0.0
  %215 = vmatpush1.msra.mxu0 %v32
  %216 = vmatprep.subr.mxu0 0.0
  %217 = vmatpush1.msra.mxu0 %v31
  %218 = vmatprep.subr.mxu0 0.0
  %219 = vmatpush1.msra.mxu0 %v30
  %220 = vmatprep.subr.mxu0 0.0
  %221 = vmatpush1.msra.mxu0 %v29
  %222 = vmatprep.subr.mxu0 0.0
  %223 = vmatpush1.msra.mxu0 %v28
  %224 = vmatprep.subr.mxu0 0.0
  %225 = vmatpush1.msra.mxu0 %v27
  %226 = vmatprep.subr.mxu0 0.0
  %227 = vmatpush1.msra.mxu0 %v26
  %228 = vmatprep.subr.mxu0 0.0
  %229 = vmatpush1.msra.mxu0 %v25
  %230 = vmatprep.subr.mxu0 0.0
  %231 = vmatpush1.msra.mxu0 %v24
  %232 = vmatprep.subr.mxu0 0.0
  %233 = vmatpush1.msra.mxu0 %v23
  %234 = vmatprep.subr.mxu0 0.0
  %235 = vmatpush2.msra.mxu0 %v54
  %236 = vmatprep.subr.mxu0 0.0
  %237 = vmatpush2.msra.mxu0 %v53
  %238 = vmatprep.subr.mxu0 0.0
  %239 = vmatpush2.msra.mxu0 %v52
  %240 = vmatprep.subr.mxu0 0.0
  %241 = vmatpush2.msra.mxu0 %v51
  %242 = vmatprep.subr.mxu0 0.0
  %243 = vmatpush2.msra.mxu0 %v50
  %244 = vmatprep.subr.mxu0 0.0
  %245 = vmatpush2.msra.mxu0 %v49
  %246 = vmatprep.subr.mxu0 0.0
  %247 = vmatpush2.msra.mxu0 %v48
  %248 = vmatprep.subr.mxu0 0.0
  %249 = vmatpush2.msra.mxu0 %v47
  %250 = vmatprep.subr.mxu0 0.0
  %251 = vmatpush2.msra.mxu0 %v46
  %252 = vmatprep.subr.mxu0 0.0
  %253 = vmatpush2.msra.mxu0 %v45
  %254 = vmatprep.subr.mxu0 0.0
  %255 = vmatpush2.msra.mxu0 %v44
  %256 = vmatprep.subr.mxu0 0.0
  %257 = vmatpush2.msra.mxu0 %v43
  %258 = vmatprep.subr.mxu0 0.0
  %259 = vmatpush2.msra.mxu0 %v42
  %260 = vmatprep.subr.mxu0 0.0
  %261 = vmatpush2.msra.mxu0 %v41
  %262 = vmatprep.subr.mxu0 0.0
  %263 = vmatpush2.msra.mxu0 %v40
  %264 = vmatprep.subr.mxu0 0.0
  %265 = vmatpush2.msra.mxu0 %v39
  %266 = vmatprep.mubr.f32.mxu0 %v175
  %267 = vmatmul.mubr.f32.gmra.mxu0 %v167
  %v268 = vpop.f32.mrf.mxu0
  %v269 = vadd.f32 %v156, %v268
  %v270 = vpop.f32.mrf.mxu0
  %271 = vdwg.mxu0
  %272 = vmatprep.subr.mxu0 0.0
  %273 = vmatpush1.msra.mxu0 %v70
  %274 = vmatprep.subr.mxu0 0.0
  %275 = vmatpush1.msra.mxu0 %v69
  %276 = vmatprep.subr.mxu0 0.0
  %277 = vmatpush1.msra.mxu0 %v68
  %278 = vmatprep.subr.mxu0 0.0
  %279 = vmatpush1.msra.mxu0 %v67
  %280 = vmatprep.subr.mxu0 0.0
  %281 = vmatpush1.msra.mxu0 %v66
  %282 = vmatprep.subr.mxu0 0.0
  %283 = vmatpush1.msra.mxu0 %v65
  %284 = vmatprep.subr.mxu0 0.0
  %285 = vmatpush1.msra.mxu0 %v64
  %286 = vmatprep.subr.mxu0 0.0
  %287 = vmatpush1.msra.mxu0 %v63
  %288 = vmatprep.subr.mxu0 0.0
  %289 = vmatpush1.msra.mxu0 %v62
  %290 = vmatprep.subr.mxu0 0.0
  %291 = vmatpush1.msra.mxu0 %v61
  %292 = vmatprep.subr.mxu0 0.0
  %293 = vmatpush1.msra.mxu0 %v60
  %294 = vmatprep.subr.mxu0 0.0
  %295 = vmatpush1.msra.mxu0 %v59
  %296 = vmatprep.subr.mxu0 0.0
  %297 = vmatpush1.msra.mxu0 %v58
  %298 = vmatprep.subr.mxu0 0.0
  %299 = vmatpush1.msra.mxu0 %v57
  %300 = vmatprep.subr.mxu0 0.0
  %301 = vmatpush1.msra.mxu0 %v56
  %302 = vmatprep.subr.mxu0 0.0
  %303 = vmatpush1.msra.mxu0 %v55
  %304 = vmatprep.subr.mxu0 0.0
  %305 = vmatpush2.msra.mxu0 %v86
  %306 = vmatprep.subr.mxu0 0.0
  %307 = vmatpush2.msra.mxu0 %v85
  %308 = vmatprep.subr.mxu0 0.0
  %309 = vmatpush2.msra.mxu0 %v84
  %310 = vmatprep.subr.mxu0 0.0
  %311 = vmatpush2.msra.mxu0 %v83
  %312 = vmatprep.subr.mxu0 0.0
  %313 = vmatpush2.msra.mxu0 %v82
  %314 = vmatprep.subr.mxu0 0.0
  %315 = vmatpush2.msra.mxu0 %v81
  %316 = vmatprep.subr.mxu0 0.0
  %317 = vmatpush2.msra.mxu0 %v80
  %318 = vmatprep.subr.mxu0 0.0
  %319 = vmatpush2.msra.mxu0 %v79
  %320 = vmatprep.subr.mxu0 0.0
  %321 = vmatpush2.msra.mxu0 %v78
  %322 = vmatprep.subr.mxu0 0.0
  %323 = vmatpush2.msra.mxu0 %v77
  %324 = vmatprep.subr.mxu0 0.0
  %325 = vmatpush2.msra.mxu0 %v76
  %326 = vmatprep.subr.mxu0 0.0
  %327 = vmatpush2.msra.mxu0 %v75
  %328 = vmatprep.subr.mxu0 0.0
  %329 = vmatpush2.msra.mxu0 %v74
  %330 = vmatprep.subr.mxu0 0.0
  %331 = vmatpush2.msra.mxu0 %v73
  %332 = vmatprep.subr.mxu0 0.0
  %333 = vmatpush2.msra.mxu0 %v72
  %334 = vmatprep.subr.mxu0 0.0
  %335 = vmatpush2.msra.mxu0 %v71
  %336 = vmatprep.mubr.f32.mxu0 %v176
  %337 = vmatmul.mubr.f32.gmra.mxu0 %v174
  %v338 = vpop.f32.mrf.mxu0
  %v339 = vadd.f32 %v269, %v338
  %v340 = vpop.f32.mrf.mxu0
  %341 = vdwg.mxu0
  %342 = vmatprep.subr.mxu0 0.0
  %343 = vmatpush1.msra.mxu0 %v102
  %344 = vmatprep.subr.mxu0 0.0
  %345 = vmatpush1.msra.mxu0 %v101
  %346 = vmatprep.subr.mxu0 0.0
  %347 = vmatpush1.msra.mxu0 %v100
  %348 = vmatprep.subr.mxu0 0.0
  %349 = vmatpush1.msra.mxu0 %v99
  %350 = vmatprep.subr.mxu0 0.0
  %351 = vmatpush1.msra.mxu0 %v98
  %352 = vmatprep.subr.mxu0 0.0
  %353 = vmatpush1.msra.mxu0 %v97
  %354 = vmatprep.subr.mxu0 0.0
  %355 = vmatpush1.msra.mxu0 %v96
  %356 = vmatprep.subr.mxu0 0.0
  %357 = vmatpush1.msra.mxu0 %v95
  %358 = vmatprep.subr.mxu0 0.0
  %359 = vmatpush1.msra.mxu0 %v94
  %360 = vmatprep.subr.mxu0 0.0
  %361 = vmatpush1.msra.mxu0 %v93
  %362 = vmatprep.subr.mxu0 0.0
  %363 = vmatpush1.msra.mxu0 %v92
  %364 = vmatprep.subr.mxu0 0.0
  %365 = vmatpush1.msra.mxu0 %v91
  %366 = vmatprep.subr.mxu0 0.0
  %367 = vmatpush1.msra.mxu0 %v90
  %368 = vmatprep.subr.mxu0 0.0
  %369 = vmatpush1.msra.mxu0 %v89
  %370 = vmatprep.subr.mxu0 0.0
  %371 = vmatpush1.msra.mxu0 %v88
  %372 = vmatprep.subr.mxu0 0.0
  %373 = vmatpush1.msra.mxu0 %v87
  %374 = vmatprep.subr.mxu0 0.0
  %375 = vmatpush2.msra.mxu0 %v118
  %376 = vmatprep.subr.mxu0 0.0
  %377 = vmatpush2.msra.mxu0 %v117
  %378 = vmatprep.subr.mxu0 0.0
  %379 = vmatpush2.msra.mxu0 %v116
  %380 = vmatprep.subr.mxu0 0.0
  %381 = vmatpush2.msra.mxu0 %v115
  %382 = vmatprep.subr.mxu0 0.0
  %383 = vmatpush2.msra.mxu0 %v114
  %384 = vmatprep.subr.mxu0 0.0
  %385 = vmatpush2.msra.mxu0 %v113
  %386 = vmatprep.subr.mxu0 0.0
  %387 = vmatpush2.msra.mxu0 %v112
  %388 = vmatprep.subr.mxu0 0.0
  %389 = vmatpush2.msra.mxu0 %v111
  %390 = vmatprep.subr.mxu0 0.0
  %391 = vmatpush2.msra.mxu0 %v110
  %392 = vmatprep.subr.mxu0 0.0
  %393 = vmatpush2.msra.mxu0 %v109
  %394 = vmatprep.subr.mxu0 0.0
  %395 = vmatpush2.msra.mxu0 %v108
  %396 = vmatprep.subr.mxu0 0.0
  %397 = vmatpush2.msra.mxu0 %v107
  %398 = vmatprep.subr.mxu0 0.0
  %399 = vmatpush2.msra.mxu0 %v106
  %400 = vmatprep.subr.mxu0 0.0
  %401 = vmatpush2.msra.mxu0 %v105
  %402 = vmatprep.subr.mxu0 0.0
  %403 = vmatpush2.msra.mxu0 %v104
  %404 = vmatprep.subr.mxu0 0.0
  %405 = vmatpush2.msra.mxu0 %v103
  %406 = vmatprep.mubr.f32.mxu0 %v192
  %407 = vmatmul.mubr.f32.gmra.mxu0 %v184
  %v408 = vpop.f32.mrf.mxu0
  %v409 = vadd.f32 %v339, %v408
  %v410 = vpop.f32.mrf.mxu0
  %411 = vdwg.mxu0
  %412 = vmatprep.subr.mxu0 0.0
  %413 = vmatpush1.msra.mxu0 %v134
  %414 = vmatprep.subr.mxu0 0.0
  %415 = vmatpush1.msra.mxu0 %v133
  %416 = vmatprep.subr.mxu0 0.0
  %417 = vmatpush1.msra.mxu0 %v132
  %418 = vmatprep.subr.mxu0 0.0
  %419 = vmatpush1.msra.mxu0 %v131
  %420 = vmatprep.subr.mxu0 0.0
  %421 = vmatpush1.msra.mxu0 %v130
  %422 = vmatprep.subr.mxu0 0.0
  %423 = vmatpush1.msra.mxu0 %v129
  %424 = vmatprep.subr.mxu0 0.0
  %425 = vmatpush1.msra.mxu0 %v128
  %426 = vmatprep.subr.mxu0 0.0
  %427 = vmatpush1.msra.mxu0 %v127
  %428 = vmatprep.subr.mxu0 0.0
  %429 = vmatpush1.msra.mxu0 %v126
  %430 = vmatprep.subr.mxu0 0.0
  %431 = vmatpush1.msra.mxu0 %v125
  %432 = vmatprep.subr.mxu0 0.0
  %433 = vmatpush1.msra.mxu0 %v124
  %434 = vmatprep.subr.mxu0 0.0
  %435 = vmatpush1.msra.mxu0 %v123
  %436 = vmatprep.subr.mxu0 0.0
  %437 = vmatpush1.msra.mxu0 %v122
  %438 = vmatprep.subr.mxu0 0.0
  %439 = vmatpush1.msra.mxu0 %v121
  %440 = vmatprep.subr.mxu0 0.0
  %441 = vmatpush1.msra.mxu0 %v120
  %442 = vmatprep.subr.mxu0 0.0
  %443 = vmatpush1.msra.mxu0 %v119
  %444 = vmatprep.subr.mxu0 0.0
  %445 = vmatpush2.msra.mxu0 %v150
  %446 = vmatprep.subr.mxu0 0.0
  %447 = vmatpush2.msra.mxu0 %v149
  %448 = vmatprep.subr.mxu0 0.0
  %449 = vmatpush2.msra.mxu0 %v148
  %450 = vmatprep.subr.mxu0 0.0
  %451 = vmatpush2.msra.mxu0 %v147
  %452 = vmatprep.subr.mxu0 0.0
  %453 = vmatpush2.msra.mxu0 %v146
  %454 = vmatprep.subr.mxu0 0.0
  %455 = vmatpush2.msra.mxu0 %v145
  %456 = vmatprep.subr.mxu0 0.0
  %457 = vmatpush2.msra.mxu0 %v144
  %458 = vmatprep.subr.mxu0 0.0
  %459 = vmatpush2.msra.mxu0 %v143
  %460 = vmatprep.subr.mxu0 0.0
  %461 = vmatpush2.msra.mxu0 %v142
  %462 = vmatprep.subr.mxu0 0.0
  %463 = vmatpush2.msra.mxu0 %v141
  %464 = vmatprep.subr.mxu0 0.0
  %465 = vmatpush2.msra.mxu0 %v140
  %466 = vmatprep.subr.mxu0 0.0
  %467 = vmatpush2.msra.mxu0 %v139
  %468 = vmatprep.subr.mxu0 0.0
  %469 = vmatpush2.msra.mxu0 %v138
  %470 = vmatprep.subr.mxu0 0.0
  %471 = vmatpush2.msra.mxu0 %v137
  %472 = vmatprep.subr.mxu0 0.0
  %473 = vmatpush2.msra.mxu0 %v136
  %474 = vmatprep.subr.mxu0 0.0
  %475 = vmatpush2.msra.mxu0 %v135
  %476 = vmatprep.mubr.f32.mxu0 %v193
  %477 = vmatmul.mubr.f32.gmra.mxu0 %v191
  %v478 = vpop.f32.mrf.mxu0
  %v479 = vadd.f32 %v409, %v478
  %v480 = vpop.f32.mrf.mxu0
  %481 = vdwg.mxu0
  %v482 = vmax.f32 %v479, 0.0
  %v483 = vld [vmem:[%s3] sm:$0x1]
  %v485 = vlaneseq
  %v486 = vshrl.u32 %v485, 7
  %v487 = vsub.s32 0, %v486
  %v488 = vrot.slane %v483, %v487
  %v490 = vmul.f32 %v482, %v488
  %vm491 = vcmask 254976
  %v492 = vsel %vm491, %v490, 0.0
  %493 = vadd.xlane.f32.xlu0 %v492
  %v494 = vpop.xlane.xlu0 %493
  %s495 = sld [smem:[#allocation2]]
  %v496 = vstv %s495
  %v497 = vadd.f32 %v494, %v496
  %vm498 = vcmask 1024
  %499 = vst.msk [vmem:[%s5] sm:$0x3] %vm498, %v497
  // Predicated region
  $region22: #{mlp_forward.1} parent=0 // pred_check
    _
  $region23: #{mlp_forward.1} parent=0 // pred_check_branch
    %501 = sbr.rel (0) target = $region25
  $region24: #{mlp_forward.1} parent=0 // pred_region
    _
  $region25: #{mlp_forward.1} parent=0 // pred_fallthru
    _
  // Predicated region
  $region26: #{mlp_forward.1} parent=0 // pred_check
    _
  $region27: #{mlp_forward.1} parent=0 // pred_check_branch
    %503 = sbr.rel (0) target = $region29
  $region28: #{mlp_forward.1} parent=0 // pred_region
    _
  $region29: #{mlp_forward.1} parent=0 // pred_fallthru
    _

</llo_original>
